<compile_context>
chip_gen: v7x
topology: tpu7x:2x2x1
jax: 0.10.0
libtpu: 0.0.40
codegen_flags: <defaults>
</compile_context>

<pallas_src>
import jax
import jax.numpy as jnp
from jax.experimental import pallas as pl
from jax.experimental.pallas import tpu as pltpu


def _round_up(a, m):
    return ((a + m - 1) // m) * m


def _mlp_kernel(x_ref, w1_ref, b1_ref, w2_ref, b2_ref, w3_ref, b3_ref, o_ref):
    def leaky(h):
        # leaky_relu(h) == max(h, 0.01*h) for the default negative_slope=0.01.
        return jnp.maximum(h, 0.01 * h)

    # Layer 1: bf16 MXU operands, f32 accumulate; bias + LeakyReLU in f32.
    h1 = jnp.dot(x_ref[...], w1_ref[...], preferred_element_type=jnp.float32)
    h1 = leaky(h1 + b1_ref[...])

    # Layer 2: downcast only the MXU operand; epilogue stays f32.
    h2 = jnp.dot(h1.astype(jnp.bfloat16), w2_ref[...],
                 preferred_element_type=jnp.float32)
    h2 = leaky(h2 + b2_ref[...])

    # Output layer: N=1 matmul -> VPU multiply + lane reduce instead of MXU.
    # w3_ref is a (1, l2nodes) f32 row; b3 is a scalar read from SMEM.
    out = jnp.sum(h2 * w3_ref[...], axis=-1, keepdims=True) + b3_ref[0]
    o_ref[...] = out.astype(o_ref.dtype)


def ordinal_regression_forward(x, params, *, tile_batch=1024):
    """Fused 3-layer MLP forward. Returns (output[B, 1] f32, theta)."""
    w1, b1 = params["w1"], params["b1"]
    w2, b2 = params["w2"], params["b2"]
    w3, b3 = params["w3"], params["b3"]
    theta = params["theta"]

    B, F = x.shape
    nodes = w1.shape[1]
    l2nodes = w2.shape[1]

    # Batch tile: multiple of 16 (bf16 sublane packing), capped at tile_batch
    # rows so large batches get a multi-step, double-buffered grid.
    TB = min(int(tile_batch), _round_up(B, 16))
    Bp = _round_up(B, TB)
    if Bp != B:
        x = jnp.pad(x, ((0, Bp - B), (0, 0)))

    # bf16 MXU operands; biases and the tiny final-layer row stay f32.
    x_bf = x.astype(jnp.bfloat16)
    w1_bf = w1.astype(jnp.bfloat16)
    w2_bf = w2.astype(jnp.bfloat16)
    w3_row = w3.reshape(1, l2nodes).astype(jnp.float32)   # hoisted transpose
    b3_s = b3.reshape(1).astype(jnp.float32)               # 1-D SMEM scalar

    grid = (Bp // TB,)

    flops = 2 * Bp * (F * nodes + nodes * l2nodes + l2nodes)
    bytes_accessed = (Bp * F * 2 + Bp * 4
                      + F * nodes * 2 + nodes * 4
                      + nodes * l2nodes * 2 + l2nodes * 4
                      + l2nodes * 4 + 4)

    # TODO(synk): lane-dense (1, TB) output slab skipped — it would require an
    # in-kernel sublane->lane relayout of similar cost to the masked stores it
    # removes, and output traffic (4 B/row) is negligible vs the x stream.
    out = pl.pallas_call(
        _mlp_kernel,
        out_shape=jax.ShapeDtypeStruct((Bp, 1), jnp.float32),
        grid=grid,
        in_specs=[
            pl.BlockSpec((TB, F), lambda i: (i, 0)),             # x tile
            pl.BlockSpec((F, nodes), lambda i: (0, 0)),          # w1 (resident)
            pl.BlockSpec((1, nodes), lambda i: (0, 0)),          # b1
            pl.BlockSpec((nodes, l2nodes), lambda i: (0, 0)),    # w2
            pl.BlockSpec((1, l2nodes), lambda i: (0, 0)),        # b2
            pl.BlockSpec((1, l2nodes), lambda i: (0, 0)),        # w3 as row
            pl.BlockSpec(memory_space=pltpu.MemorySpace.SMEM),   # b3 scalar
        ],
        out_specs=pl.BlockSpec((TB, 1), lambda i: (i, 0)),
        compiler_params=pltpu.CompilerParams(
            dimension_semantics=("parallel",)),
        cost_estimate=pl.CostEstimate(
            flops=flops, transcendentals=0, bytes_accessed=bytes_accessed),
    )(x_bf, w1_bf, b1, w2_bf, b2, w3_row, b3_s)

    return out[:B], theta


def init_params(key, n_features, start, end, n_classes, nodes):
    """Deterministic parameter init matching the module's shapes."""
    l2nodes = nodes // 2
    k1, k2, k3, k4, k5, k6 = jax.random.split(key, 6)

    def linear_init(kw, kb, fan_in, fan_out):
        # PyTorch nn.Linear default: U(-1/sqrt(fan_in), 1/sqrt(fan_in))
        bound = 1.0 / jnp.sqrt(jnp.float32(fan_in))
        w = jax.random.uniform(kw, (fan_in, fan_out), jnp.float32, -bound, bound)
        b = jax.random.uniform(kb, (1, fan_out), jnp.float32, -bound, bound)
        return w, b

    w1, b1 = linear_init(k1, k2, n_features, nodes)
    w2, b2 = linear_init(k3, k4, nodes, l2nodes)
    w3, b3 = linear_init(k5, k6, l2nodes, 1)
    theta = jnp.linspace(start, end, n_classes, dtype=jnp.float32)

    return {"w1": w1, "b1": b1, "w2": w2, "b2": b2,
            "w3": w3, "b3": b3, "theta": theta}


def _ref_forward(x, params):
    """Plain-JAX reference with the same bf16 operand casting as the kernel."""
    def leaky(a):
        return jnp.where(a > 0, a, 0.01 * a)
    h = jnp.dot(x.astype(jnp.bfloat16), params["w1"].astype(jnp.bfloat16),
                preferred_element_type=jnp.float32) + params["b1"]
    h = leaky(h)
    h = jnp.dot(h.astype(jnp.bfloat16), params["w2"].astype(jnp.bfloat16),
                preferred_element_type=jnp.float32) + params["b2"]
    h = leaky(h)
    return jnp.dot(h, params["w3"]) + params["b3"]


if __name__ == "__main__":
    # Small, module-consistent shapes.
    batch = 8
    n_features = 32
    nodes = 64          # l2nodes = 32
    start, end, n_classes = -2.0, 2.0, 5

    key = jax.random.PRNGKey(0)
    kx, kp = jax.random.split(key)
    x = jax.random.normal(kx, (batch, n_features), dtype=jnp.float32)
    params = init_params(kp, n_features, start, end, n_classes, nodes)

    out, theta = ordinal_regression_forward(x, params)
    out = jax.block_until_ready(out)
    theta = jax.block_until_ready(theta)

    ref = _ref_forward(x, params)

    assert out.shape == (batch, 1)
    assert theta.shape == (n_classes,)
    assert jnp.allclose(out, ref, atol=1e-3, rtol=1e-3), (
        f"max abs err {jnp.max(jnp.abs(out - ref))}")

    print("KERNEL_OK")
</pallas_src>

<mosaic_0001>
module attributes {stable_mosaic.version = 11 : i64} {
  func.func @_mlp_kernel(%arg0: i32, %arg1: memref<16x32xbf16, #tpu.memory_space<vmem>>, %arg2: memref<32x64xbf16, #tpu.memory_space<vmem>>, %arg3: memref<1x64xf32, #tpu.memory_space<vmem>>, %arg4: memref<64x32xbf16, #tpu.memory_space<vmem>>, %arg5: memref<1x32xf32, #tpu.memory_space<vmem>>, %arg6: memref<1x32xf32, #tpu.memory_space<vmem>>, %arg7: memref<1xf32, #tpu.memory_space<smem>>, %arg8: memref<16x1xf32, #tpu.memory_space<vmem>>) attributes {dimension_semantics = [#tpu.dimension_semantics<parallel>], iteration_bounds = array<i64: 1>, scalar_prefetch = 0 : i64, scratch_operands = 0 : i64, tpu.core_type = #tpu.core_type<tc>, window_params = [{transform_indices = @transform_0, window_bounds = array<i64: 16, 32>}, {pipeline_mode = #tpu.pipeline_mode<synchronous>, transform_indices = @transform_1, window_bounds = array<i64: 32, 64>}, {pipeline_mode = #tpu.pipeline_mode<synchronous>, transform_indices = @transform_2, window_bounds = array<i64: 1, 64>}, {pipeline_mode = #tpu.pipeline_mode<synchronous>, transform_indices = @transform_3, window_bounds = array<i64: 64, 32>}, {pipeline_mode = #tpu.pipeline_mode<synchronous>, transform_indices = @transform_4, window_bounds = array<i64: 1, 32>}, {pipeline_mode = #tpu.pipeline_mode<synchronous>, transform_indices = @transform_5, window_bounds = array<i64: 1, 32>}, {transform_indices = @transform_6, window_bounds = array<i64: 1>}, {transform_indices = @transform_7, window_bounds = array<i64: 16, 1>}]} {
    %c0 = arith.constant 0 : index
    %c0_0 = arith.constant 0 : index
    %0 = vector.load %arg1[%c0, %c0_0] : memref<16x32xbf16, #tpu.memory_space<vmem>>, vector<16x32xbf16>
    %c0_1 = arith.constant 0 : index
    %c0_2 = arith.constant 0 : index
    %1 = vector.load %arg2[%c0_1, %c0_2] : memref<32x64xbf16, #tpu.memory_space<vmem>>, vector<32x64xbf16>
    %cst = arith.constant dense<0.000000e+00> : vector<16x64xf32>
    %2 = tpu.matmul %0, %1, %cst {dimension_numbers = #tpu.dot_dimension_numbers<[1], [0], [0], [1], [0, 0, 1, 1], [], []>} : vector<16x32xbf16>, vector<32x64xbf16>, vector<16x64xf32> -> vector<16x64xf32>
    %c0_3 = arith.constant 0 : index
    %c0_4 = arith.constant 0 : index
    %3 = vector.load %arg3[%c0_3, %c0_4] : memref<1x64xf32, #tpu.memory_space<vmem>>, vector<1x64xf32>
    %4 = vector.broadcast %3 : vector<1x64xf32> to vector<16x64xf32>
    %5 = arith.addf %2, %4 : vector<16x64xf32>
    %cst_5 = arith.constant 0.00999999977 : f32
    %6 = vector.broadcast %cst_5 : f32 to vector<16x64xf32>
    %7 = arith.mulf %6, %5 : vector<16x64xf32>
    %8 = arith.maximumf %5, %7 : vector<16x64xf32>
    %9 = arith.truncf %8 : vector<16x64xf32> to vector<16x64xbf16>
    %c0_6 = arith.constant 0 : index
    %c0_7 = arith.constant 0 : index
    %10 = vector.load %arg4[%c0_6, %c0_7] : memref<64x32xbf16, #tpu.memory_space<vmem>>, vector<64x32xbf16>
    %cst_8 = arith.constant dense<0.000000e+00> : vector<16x32xf32>
    %11 = tpu.matmul %9, %10, %cst_8 {dimension_numbers = #tpu.dot_dimension_numbers<[1], [0], [0], [1], [0, 0, 1, 1], [], []>} : vector<16x64xbf16>, vector<64x32xbf16>, vector<16x32xf32> -> vector<16x32xf32>
    %c0_9 = arith.constant 0 : index
    %c0_10 = arith.constant 0 : index
    %12 = vector.load %arg5[%c0_9, %c0_10] : memref<1x32xf32, #tpu.memory_space<vmem>>, vector<1x32xf32>
    %13 = vector.broadcast %12 : vector<1x32xf32> to vector<16x32xf32>
    %14 = arith.addf %11, %13 : vector<16x32xf32>
    %cst_11 = arith.constant 0.00999999977 : f32
    %15 = vector.broadcast %cst_11 : f32 to vector<16x32xf32>
    %16 = arith.mulf %15, %14 : vector<16x32xf32>
    %17 = arith.maximumf %14, %16 : vector<16x32xf32>
    %c0_12 = arith.constant 0 : index
    %c0_13 = arith.constant 0 : index
    %18 = vector.load %arg6[%c0_12, %c0_13] : memref<1x32xf32, #tpu.memory_space<vmem>>, vector<1x32xf32>
    %19 = vector.broadcast %18 : vector<1x32xf32> to vector<16x32xf32>
    %20 = arith.mulf %17, %19 : vector<16x32xf32>
    %cst_14 = arith.constant dense<0.000000e+00> : vector<16xf32>
    %21 = vector.multi_reduction <add>, %20, %cst_14 [1] : vector<16x32xf32> to vector<16xf32>
    %22 = vector.shape_cast %21 : vector<16xf32> to vector<16x1xf32>
    %c0_15 = arith.constant 0 : index
    %23 = memref.load %arg7[%c0_15] : memref<1xf32, #tpu.memory_space<smem>>
    %24 = vector.broadcast %23 : f32 to vector<16x1xf32>
    %25 = arith.addf %22, %24 : vector<16x1xf32>
    %c0_16 = arith.constant 0 : index
    %c0_17 = arith.constant 0 : index
    %26 = vector.load %arg8[%c0_16, %c0_17] : memref<16x1xf32, #tpu.memory_space<vmem>>, vector<16x1xf32>
    tpu.vector_store %arg8[%c0_16, %c0_17], %25 {strides = array<i32>} : memref<16x1xf32, #tpu.memory_space<vmem>>, vector<16x1xf32>,
    return
  }
  func.func @transform_0(%arg0: i32) -> (i32, i32) {
    %c0_i32 = arith.constant 0 : i32
    %c0_i32_0 = arith.constant 0 : i32
    return %arg0, %c0_i32 : i32, i32
  }
  func.func @transform_1(%arg0: i32) -> (i32, i32) {
    %c0_i32 = arith.constant 0 : i32
    %c0_i32_0 = arith.constant 0 : i32
    %c0_i32_1 = arith.constant 0 : i32
    return %c0_i32, %c0_i32_0 : i32, i32
  }
  func.func @transform_2(%arg0: i32) -> (i32, i32) {
    %c0_i32 = arith.constant 0 : i32
    %c0_i32_0 = arith.constant 0 : i32
    %c0_i32_1 = arith.constant 0 : i32
    return %c0_i32, %c0_i32_0 : i32, i32
  }
  func.func @transform_3(%arg0: i32) -> (i32, i32) {
    %c0_i32 = arith.constant 0 : i32
    %c0_i32_0 = arith.constant 0 : i32
    %c0_i32_1 = arith.constant 0 : i32
    return %c0_i32, %c0_i32_0 : i32, i32
  }
  func.func @transform_4(%arg0: i32) -> (i32, i32) {
    %c0_i32 = arith.constant 0 : i32
    %c0_i32_0 = arith.constant 0 : i32
    %c0_i32_1 = arith.constant 0 : i32
    return %c0_i32, %c0_i32_0 : i32, i32
  }
  func.func @transform_5(%arg0: i32) -> (i32, i32) {
    %c0_i32 = arith.constant 0 : i32
    %c0_i32_0 = arith.constant 0 : i32
    %c0_i32_1 = arith.constant 0 : i32
    return %c0_i32, %c0_i32_0 : i32, i32
  }
  func.func @transform_6(%arg0: i32) -> i32 {
    %c0_i32 = arith.constant 0 : i32
    %c0_i32_0 = arith.constant 0 : i32
    return %c0_i32 : i32
  }
  func.func @transform_7(%arg0: i32) -> (i32, i32) {
    %c0_i32 = arith.constant 0 : i32
    %c0_i32_0 = arith.constant 0 : i32
    return %arg0, %c0_i32 : i32, i32
  }
}

</mosaic_0001>

<llo_original>
// kernel: tpu_custom_call.1
$region0: #{tpu_custom_call.1}
  #allocation0 [shape = 'u32[]', space=smem, size = 0x4, offset = 0x4, fixed_abs, tag = 'smem constant byte address 0x4 - core index']
  #allocation1 [shape = 'u32[144,128]{1,0:T(1,128)}', space=vmem, size = 0x12000, scoped, tag = 'internal scratch']
  #allocation2 [shape = 'f32[1]{0:T(128)S(6)}', space=smem, size = 0x200, scoped, tag = 'scoped memory for tpu_custom_call.1']
  %s0 = inlined_call_operand.vmem [shape: bf16[16,32], index: 0, kind: input, shape index: {}]
  %s1 = inlined_call_operand.vmem [shape: bf16[32,64], index: 1, kind: input, shape index: {}]
  %s2 = inlined_call_operand.vmem [shape: f32[1,64], index: 2, kind: input, shape index: {}]
  %s3 = inlined_call_operand.vmem [shape: bf16[64,32], index: 3, kind: input, shape index: {}]
  %s4 = inlined_call_operand.vmem [shape: f32[1,32], index: 4, kind: input, shape index: {}]
  %s5 = inlined_call_operand.vmem [shape: f32[1,32], index: 5, kind: input, shape index: {}]
  %s6 = inlined_call_operand.<no memory space> [shape: f32[1], index: 6, kind: input, shape index: {}]
  %s7 = inlined_call_operand.vmem [shape: f32[16,1], index: 7, kind: output, shape index: {}]
  %s8 = sld [smem:[#allocation0]]
  $region38: #{tpu_custom_call.1} parent=0
    _
  %s10 = ssub.s32 1, %s8
  %s11 = scalar_select 0, %s10, %s8
  %12 = sst [smem:[#allocation2]] %s6
  // Predicated region
  $region2: #{tpu_custom_call.1} parent=0 // pred_check
    _
  $region3: #{tpu_custom_call.1} parent=0 // pred_check_branch
    %14 = sbr.rel (0) target = $region5
  $region4: #{tpu_custom_call.1} parent=0 // pred_region
    _
  $region5: #{tpu_custom_call.1} parent=0 // pred_fallthru
    _
  // Predicated region
  $region6: #{tpu_custom_call.1} parent=0 // pred_check
    _
  $region7: #{tpu_custom_call.1} parent=0 // pred_check_branch
    %16 = sbr.rel (0) target = $region9
  $region8: #{tpu_custom_call.1} parent=0 // pred_region
    _
  $region9: #{tpu_custom_call.1} parent=0 // pred_fallthru
    _
  // Predicated region
  $region10: #{tpu_custom_call.1} parent=0 // pred_check
    _
  $region11: #{tpu_custom_call.1} parent=0 // pred_check_branch
    %18 = sbr.rel (0) target = $region13
  $region12: #{tpu_custom_call.1} parent=0 // pred_region
    _
  $region13: #{tpu_custom_call.1} parent=0 // pred_fallthru
    _
  // Predicated region
  $region14: #{tpu_custom_call.1} parent=0 // pred_check
    _
  $region15: #{tpu_custom_call.1} parent=0 // pred_check_branch
    %20 = sbr.rel (0) target = $region17
  $region16: #{tpu_custom_call.1} parent=0 // pred_region
    _
  $region17: #{tpu_custom_call.1} parent=0 // pred_fallthru
    _
  // Predicated region
  $region18: #{tpu_custom_call.1} parent=0 // pred_check
    _
  $region19: #{tpu_custom_call.1} parent=0 // pred_check_branch
    %22 = sbr.rel (0) target = $region21
  $region20: #{tpu_custom_call.1} parent=0 // pred_region
    _
  $region21: #{tpu_custom_call.1} parent=0 // pred_fallthru
    _
  // Predicated region
  $region22: #{tpu_custom_call.1} parent=0 // pred_check
    _
  $region23: #{tpu_custom_call.1} parent=0 // pred_check_branch
    %24 = sbr.rel (0) target = $region25
  $region24: #{tpu_custom_call.1} parent=0 // pred_region
    _
  $region25: #{tpu_custom_call.1} parent=0 // pred_fallthru
    _
  // Predicated region
  $region26: #{tpu_custom_call.1} parent=0 // pred_check
    _
  $region27: #{tpu_custom_call.1} parent=0 // pred_check_branch
    %26 = sbr.rel (0) target = $region29
  $region28: #{tpu_custom_call.1} parent=0 // pred_region
    _
  $region29: #{tpu_custom_call.1} parent=0 // pred_fallthru
    _
  %v28 = vld [vmem:[%s0] sm:$0xf]
  %v29 = vld [vmem:[%s0 + $0x4] sm:$0xf]
  %v30 = vld [vmem:[%s1] sm:$0xf]
  %v31 = vld [vmem:[%s1 + $0x4] sm:$0xf]
  %v32 = vld [vmem:[%s1 + $0x8] sm:$0xf]
  %v33 = vld [vmem:[%s1 + $0xc] sm:$0xf]
  %v34 = vld [vmem:[%s2] sm:$0x1]
  %v36 = vlaneseq
  %v37 = vshrl.u32 %v36, 7
  %v38 = vsub.s32 0, %v37
  %v39 = vrot.slane %v34, %v38
  %v43 = vunpack.c.l.b16 %v28
  %v44 = vunpack.c.l.b16 %v29
  %v45 = vpack.c.b16 %v44, %v43
  %v50 = vunpack.c.l.b16 %v30
  %v51 = vunpack.c.l.b16 %v31
  %v52 = vunpack.c.l.b16 %v32
  %v53 = vunpack.c.l.b16 %v33
  %v54 = vpack.c.b16 %v51, %v50
  %v55 = vpack.c.b16 %v53, %v52
  %vm58 = vcmask 261120
  %v60 = vsel %vm58, %v45, 0
  %62 = vmatprep.subr.bf16.mxu0 0
  %63 = vmatpush1.bf16.msra.mxu0 %v54
  %64 = vmatprep.subr.bf16.mxu0 0
  %65 = vmatpush1.bf16.msra.mxu0 %v55
  %66 = vmatprep.subr.bf16.mxu0 0
  %67 = vmatpush1.bf16.msra.mxu0 0
  %68 = vmatprep.subr.bf16.mxu0 0
  %69 = vmatpush1.bf16.msra.mxu0 0
  %70 = vmatprep.subr.bf16.mxu0 0
  %71 = vmatpush1.bf16.msra.mxu0 0
  %72 = vmatprep.subr.bf16.mxu0 0
  %73 = vmatpush1.bf16.msra.mxu0 0
  %74 = vmatprep.subr.bf16.mxu0 0
  %75 = vmatpush1.bf16.msra.mxu0 0
  %76 = vmatprep.subr.bf16.mxu0 0
  %77 = vmatpush1.bf16.msra.mxu0 0
  %78 = vmatprep.subr.bf16.mxu0 0
  %79 = vmatpush1.bf16.msra.mxu0 0
  %80 = vmatprep.subr.bf16.mxu0 0
  %81 = vmatpush1.bf16.msra.mxu0 0
  %82 = vmatprep.subr.bf16.mxu0 0
  %83 = vmatpush1.bf16.msra.mxu0 0
  %84 = vmatprep.subr.bf16.mxu0 0
  %85 = vmatpush1.bf16.msra.mxu0 0
  %86 = vmatprep.subr.bf16.mxu0 0
  %87 = vmatpush1.bf16.msra.mxu0 0
  %88 = vmatprep.subr.bf16.mxu0 0
  %89 = vmatpush1.bf16.msra.mxu0 0
  %90 = vmatprep.subr.bf16.mxu0 0
  %91 = vmatpush1.bf16.msra.mxu0 0
  %92 = vmatprep.subr.bf16.mxu0 0
  %93 = vmatpush1.bf16.msra.mxu0 0
  %94 = vmatprep.mubr.bf16.mxu0 0
  %95 = vmatmul.mubr.bf16.gmra.mrb[0].mxu0 %v60
  %v96 = vpop.f32.mrb[0].mxu0
  %v97 = vadd.f32 %v39, %v96
  %v98 = vpop.f32.mrb[0].mxu0
  %v99 = vpop.f32.mrb[0].mxu0
  %v100 = vadd.f32 %v39, %v99
  %v101 = vpop.f32.mrb[0].mxu0
  %102 = vdwg.mxu0
  %v103 = vmul.f32 %v97, 0.01
  %v104 = vmul.f32 %v100, 0.01
  %v105 = vmax.f32 %v97, %v103
  %v106 = vmax.f32 %v100, %v104
  %v107 = vpack.c.bf16 %v106, %v105
  %v108 = vld [vmem:[%s3] sm:$0xf]
  %v109 = vld [vmem:[%s3 + $0x4] sm:$0xf]
  %v110 = vld [vmem:[%s3 + $0x8] sm:$0xf]
  %v111 = vld [vmem:[%s3 + $0xc] sm:$0xf]
  %v112 = vld [vmem:[%s3 + $0x10] sm:$0xf]
  %v113 = vld [vmem:[%s3 + $0x14] sm:$0xf]
  %v114 = vld [vmem:[%s3 + $0x18] sm:$0xf]
  %v115 = vld [vmem:[%s3 + $0x1c] sm:$0xf]
  %v116 = vld [vmem:[%s4] sm:$0x1]
  %v118 = vlaneseq
  %v119 = vshrl.u32 %v118, 7
  %v120 = vsub.s32 0, %v119
  %v121 = vrot.slane %v116, %v120
  %v131 = vunpack.c.l.b16 %v108
  %v132 = vunpack.c.l.b16 %v109
  %v133 = vunpack.c.l.b16 %v110
  %v134 = vunpack.c.l.b16 %v111
  %v135 = vunpack.c.l.b16 %v112
  %v136 = vunpack.c.l.b16 %v113
  %v137 = vunpack.c.l.b16 %v114
  %v138 = vunpack.c.l.b16 %v115
  %v139 = vpack.c.b16 %v132, %v131
  %v140 = vpack.c.b16 %v134, %v133
  %v141 = vpack.c.b16 %v136, %v135
  %v142 = vpack.c.b16 %v138, %v137
  %vm147 = vcmask 523264
  %v149 = vsel %vm147, %v107, 0
  %151 = vmatprep.subr.bf16.mxu0 0
  %152 = vmatpush1.bf16.msra.mxu0 %v139
  %153 = vmatprep.subr.bf16.mxu0 0
  %154 = vmatpush1.bf16.msra.mxu0 %v140
  %155 = vmatprep.subr.bf16.mxu0 0
  %156 = vmatpush1.bf16.msra.mxu0 %v141
  %157 = vmatprep.subr.bf16.mxu0 0
  %158 = vmatpush1.bf16.msra.mxu0 %v142
  %159 = vmatprep.subr.bf16.mxu0 0
  %160 = vmatpush1.bf16.msra.mxu0 0
  %161 = vmatprep.subr.bf16.mxu0 0
  %162 = vmatpush1.bf16.msra.mxu0 0
  %163 = vmatprep.subr.bf16.mxu0 0
  %164 = vmatpush1.bf16.msra.mxu0 0
  %165 = vmatprep.subr.bf16.mxu0 0
  %166 = vmatpush1.bf16.msra.mxu0 0
  %167 = vmatprep.subr.bf16.mxu0 0
  %168 = vmatpush1.bf16.msra.mxu0 0
  %169 = vmatprep.subr.bf16.mxu0 0
  %170 = vmatpush1.bf16.msra.mxu0 0
  %171 = vmatprep.subr.bf16.mxu0 0
  %172 = vmatpush1.bf16.msra.mxu0 0
  %173 = vmatprep.subr.bf16.mxu0 0
  %174 = vmatpush1.bf16.msra.mxu0 0
  %175 = vmatprep.subr.bf16.mxu0 0
  %176 = vmatpush1.bf16.msra.mxu0 0
  %177 = vmatprep.subr.bf16.mxu0 0
  %178 = vmatpush1.bf16.msra.mxu0 0
  %179 = vmatprep.subr.bf16.mxu0 0
  %180 = vmatpush1.bf16.msra.mxu0 0
  %181 = vmatprep.subr.bf16.mxu0 0
  %182 = vmatpush1.bf16.msra.mxu0 0
  %183 = vmatprep.mubr.bf16.mxu0 0
  %184 = vmatmul.mubr.bf16.gmra.mrb[0].mxu0 %v149
  %v185 = vpop.f32.mrb[0].mxu0
  %v186 = vadd.f32 %v121, %v185
  %v187 = vpop.f32.mrb[0].mxu0
  %v188 = vpop.f32.mrb[0].mxu0
  %v189 = vadd.f32 %v121, %v188
  %v190 = vpop.f32.mrb[0].mxu0
  %191 = vdwg.mxu0
  %v192 = vmul.f32 %v186, 0.01
  %v193 = vmul.f32 %v189, 0.01
  %v194 = vmax.f32 %v186, %v192
  %v195 = vmax.f32 %v189, %v193
  %v196 = vld [vmem:[%s5] sm:$0x1]
  %v198 = vlaneseq
  %v199 = vshrl.u32 %v198, 7
  %v200 = vsub.s32 0, %v199
  %v201 = vrot.slane %v196, %v200
  %v203 = vmul.f32 %v194, %v201
  %v204 = vmul.f32 %v195, %v201
  %v205 = vsel %vm58, %v203, 0.0
  %206 = vadd.xlane.f32.xlu0 %v205
  %v207 = vpop.xlane.xlu0 %206
  %v208 = vsel %vm58, %v204, 0.0
  %209 = vadd.xlane.f32.xlu0 %v208
  %v210 = vpop.xlane.xlu0 %209
  %s211 = sld [smem:[#allocation2]]
  %v212 = vstv %s211
  %v213 = vadd.f32 %v207, %v212
  %v214 = vadd.f32 %v210, %v212
  %vm215 = vcmask 7168
  %216 = vst.msk [vmem:[%s7] sm:$0xff] %vm215, %v213
  %217 = vst.msk [vmem:[%s7 + $0x8] sm:$0xff] %vm215, %v214
  // Predicated region
  $region30: #{tpu_custom_call.1} parent=0 // pred_check
    _
  $region31: #{tpu_custom_call.1} parent=0 // pred_check_branch
    %219 = sbr.rel (0) target = $region33
  $region32: #{tpu_custom_call.1} parent=0 // pred_region
    _
  $region33: #{tpu_custom_call.1} parent=0 // pred_fallthru
    _
  // Predicated region
  $region34: #{tpu_custom_call.1} parent=0 // pred_check
    _
  $region35: #{tpu_custom_call.1} parent=0 // pred_check_branch
    %221 = sbr.rel (0) target = $region37
  $region36: #{tpu_custom_call.1} parent=0 // pred_region
    _
  $region37: #{tpu_custom_call.1} parent=0 // pred_fallthru
    _

</llo_original>
